<compile_context>
chip_gen: v5e
topology: v5e:2x2
jax: 0.10.0
libtpu: 0.0.40
codegen_flags: <defaults>
</compile_context>

<pallas_src>
import jax
import jax.numpy as jnp
from jax.experimental import pallas as pl
from jax.experimental.pallas import tpu as pltpu

LANE = 128
BF16_SUBLANE = 16  # bf16 packs 2 rows/sublane -> 16-row tiles avoid relayout


def _round_up(n, m):
    return ((n + m - 1) // m) * m


def _cdiv(a, b):
    return -(-a // b)


def mlp_kernel(x_ref,
               w1_ref, b1_ref,
               w2_ref, b2_ref,
               w3_ref, b3_ref,
               w4_ref, b4_ref,
               w5_ref, b5_ref,
               o_ref):
    """Whole forward pass fused; one batch tile per grid step, weights resident."""

    def dense(h_bf16, w_ref, b_ref):
        # bf16 x bf16 on the MXU, f32 accumulator, f32 bias add on the VPU.
        return jnp.dot(h_bf16, w_ref[...],
                       preferred_element_type=jnp.float32) + b_ref[...]

    # x arrives as narrow f32 (tb, in_features); cast to bf16 in-kernel (VPU, cheap)
    h = x_ref[...].astype(jnp.bfloat16)
    h = jnp.maximum(dense(h, w1_ref, b1_ref), 0.0).astype(jnp.bfloat16)
    h = jnp.maximum(dense(h, w2_ref, b2_ref), 0.0).astype(jnp.bfloat16)
    h = jnp.maximum(dense(h, w3_ref, b3_ref), 0.0).astype(jnp.bfloat16)
    h = jnp.maximum(dense(h, w4_ref, b4_ref), 0.0).astype(jnp.bfloat16)
    logits = dense(h, w5_ref, b5_ref)                              # f32 (tb, 128)

    # sigmoid = 1 / (1 + exp(-x)): exp and approx reciprocal both issue on the EUP.
    sig = pl.reciprocal(1.0 + jnp.exp(-logits), approx=True)
    o_ref[...] = sig.astype(o_ref.dtype)                           # bf16 lane-dense store


def prepare_params(params):
    """One-time glue (outside the hot path): torch-style (out, in) weights ->
    lane-padded (in_pad, out_pad) bf16 tiles; biases -> f32 (1, out_pad).
    Layer 0 keeps its real input dim (no zero K-rows); later layers pad the
    input dim to match the previous layer's padded output dim."""
    prepped = []
    for li, (W, b) in enumerate(params):
        fan_out, fan_in = W.shape
        in_pad = fan_in if li == 0 else _round_up(fan_in, LANE)
        out_pad = _round_up(fan_out, LANE)
        Wp = jnp.zeros((in_pad, out_pad), jnp.float32)
        Wp = Wp.at[:fan_in, :fan_out].set(W.T)                     # (in, out)
        bp = jnp.zeros((1, out_pad), jnp.float32)
        bp = bp.at[0, :fan_out].set(b)
        prepped.append((Wp.astype(jnp.bfloat16), bp))
    return prepped


def _pick_batch_tile(batch, batch_tile):
    """16-row-aligned batch tile; >=2 grid steps whenever batch > 32 so the
    batch axis can shard across both TCs on v7x, with minimal row padding."""
    if batch <= 2 * BF16_SUBLANE:
        return _round_up(batch, BF16_SUBLANE)
    tb_cap = min(batch_tile, _round_up(batch, BF16_SUBLANE))
    n_steps = max(2, _cdiv(batch, tb_cap))
    return _round_up(_cdiv(batch, n_steps), BF16_SUBLANE)


def net_forward(x, prepped_params, output_size, *, batch_tile=1024,
                vmem_limit_bytes=32 * 1024 * 1024):
    """x: (batch, in_features) f32. prepped_params: output of prepare_params."""
    batch, in_features = x.shape
    out_pad = prepped_params[-1][0].shape[1]

    tb = _pick_batch_tile(batch, batch_tile)
    b_pad = _round_up(batch, tb)

    # Only a (cheap, narrow f32) row-pad when batch isn't a multiple of the tile;
    # no lane padding and no wrapper-side bf16 cast pass.
    x_in = x if b_pad == batch else jnp.pad(x, ((0, b_pad - batch), (0, 0)))

    flat_args = [x_in]
    in_specs = [pl.BlockSpec((tb, in_features), lambda i: (i, 0))]
    for Wp, bp in prepped_params:
        flat_args.append(Wp)
        in_specs.append(pl.BlockSpec(Wp.shape, lambda i: (0, 0)))  # VMEM-resident
        flat_args.append(bp)
        in_specs.append(pl.BlockSpec(bp.shape, lambda i: (0, 0)))

    out_spec = pl.BlockSpec((tb, out_pad), lambda i: (i, 0))

    out_padded = pl.pallas_call(
        mlp_kernel,
        out_shape=jax.ShapeDtypeStruct((b_pad, out_pad), jnp.bfloat16),
        grid_spec=pltpu.PrefetchScalarGridSpec(
            num_scalar_prefetch=0,
            grid=(b_pad // tb,),
            in_specs=in_specs,
            out_specs=out_spec,
        ),
        compiler_params=pltpu.CompilerParams(
            dimension_semantics=("parallel",),      # shards batch across TCs (v7x)
            vmem_limit_bytes=vmem_limit_bytes,
        ),
    )(*flat_args)

    # Slice away batch padding and padded output lanes; upcast to f32 for parity
    # with the torch module's output dtype.
    return out_padded[:batch, :output_size].astype(jnp.float32)


def init_params(key, input_size, hidden_size, output_size):
    """Deterministic init mirroring torch.nn.Linear shapes (W: (out, in), b: (out,))."""
    sizes = [(hidden_size, input_size),
             (hidden_size, hidden_size),
             (hidden_size, hidden_size),
             (hidden_size, hidden_size),
             (output_size, hidden_size)]
    params = []
    for i, (fan_out, fan_in) in enumerate(sizes):
        kw, kb = jax.random.split(jax.random.fold_in(key, i))
        bound = 1.0 / jnp.sqrt(fan_in)
        W = jax.random.uniform(kw, (fan_out, fan_in), jnp.float32, -bound, bound)
        b = jax.random.uniform(kb, (fan_out,), jnp.float32, -bound, bound)
        params.append((W, b))
    return params


def reference_forward_f32(x, params):
    h = x
    for i, (W, b) in enumerate(params):
        h = h @ W.T + b
        h = jnp.maximum(h, 0.0) if i < len(params) - 1 else jax.nn.sigmoid(h)
    return h


def reference_forward_bf16(x, params):
    """Same bf16-matmul / f32-accumulate / bf16-output recipe as the kernel."""
    h = x
    for i, (W, b) in enumerate(params):
        h = jnp.dot(h.astype(jnp.bfloat16), W.T.astype(jnp.bfloat16),
                    preferred_element_type=jnp.float32) + b
        h = jnp.maximum(h, 0.0) if i < len(params) - 1 else 1.0 / (1.0 + jnp.exp(-h))
    return h.astype(jnp.bfloat16).astype(jnp.float32)


if __name__ == "__main__":
    key = jax.random.PRNGKey(0)
    batch, input_size, hidden_size, output_size = 8, 32, 64, 16

    kx, kp = jax.random.split(key)
    x = jax.random.normal(kx, (batch, input_size), jnp.float32)
    params = init_params(kp, input_size, hidden_size, output_size)

    prepped = prepare_params(params)   # transpose / pad / bf16-cast once

    out = net_forward(x, prepped, output_size)
    out = jax.block_until_ready(out)

    ref_bf16 = reference_forward_bf16(x, params)
    ref_f32 = reference_forward_f32(x, params)

    assert out.shape == (batch, output_size)
    # Check vs. a reference with identical bf16 matmul / bf16 output precision
    # (only the approx-reciprocal sigmoid differs, ~1e-3).
    assert jnp.allclose(out, ref_bf16, atol=1e-2, rtol=1e-2), \
        f"max err vs bf16 ref: {jnp.max(jnp.abs(out - ref_bf16))}"
    # Looser check vs. the exact f32 (torch-semantics) reference.
    assert jnp.allclose(out, ref_f32, atol=5e-2, rtol=5e-2), \
        f"max err vs f32 ref: {jnp.max(jnp.abs(out - ref_f32))}"

    print("KERNEL_OK")
</pallas_src>

<mosaic_0001>
module attributes {stable_mosaic.version = 11 : i64} {
  func.func @mlp_kernel(%arg0: i32, %arg1: memref<16x32xf32, #tpu.memory_space<vmem>>, %arg2: memref<32x128xbf16, #tpu.memory_space<vmem>>, %arg3: memref<1x128xf32, #tpu.memory_space<vmem>>, %arg4: memref<128x128xbf16, #tpu.memory_space<vmem>>, %arg5: memref<1x128xf32, #tpu.memory_space<vmem>>, %arg6: memref<128x128xbf16, #tpu.memory_space<vmem>>, %arg7: memref<1x128xf32, #tpu.memory_space<vmem>>, %arg8: memref<128x128xbf16, #tpu.memory_space<vmem>>, %arg9: memref<1x128xf32, #tpu.memory_space<vmem>>, %arg10: memref<128x128xbf16, #tpu.memory_space<vmem>>, %arg11: memref<1x128xf32, #tpu.memory_space<vmem>>, %arg12: memref<16x128xbf16, #tpu.memory_space<vmem>>) attributes {dimension_semantics = [#tpu.dimension_semantics<parallel>], iteration_bounds = array<i64: 1>, scalar_prefetch = 0 : i64, scratch_operands = 0 : i64, tpu.core_type = #tpu.core_type<tc>, window_params = [{transform_indices = @transform_0, window_bounds = array<i64: 16, 32>}, {pipeline_mode = #tpu.pipeline_mode<synchronous>, transform_indices = @transform_1, window_bounds = array<i64: 32, 128>}, {pipeline_mode = #tpu.pipeline_mode<synchronous>, transform_indices = @transform_2, window_bounds = array<i64: 1, 128>}, {pipeline_mode = #tpu.pipeline_mode<synchronous>, transform_indices = @transform_3, window_bounds = array<i64: 128, 128>}, {pipeline_mode = #tpu.pipeline_mode<synchronous>, transform_indices = @transform_4, window_bounds = array<i64: 1, 128>}, {pipeline_mode = #tpu.pipeline_mode<synchronous>, transform_indices = @transform_5, window_bounds = array<i64: 128, 128>}, {pipeline_mode = #tpu.pipeline_mode<synchronous>, transform_indices = @transform_6, window_bounds = array<i64: 1, 128>}, {pipeline_mode = #tpu.pipeline_mode<synchronous>, transform_indices = @transform_7, window_bounds = array<i64: 128, 128>}, {pipeline_mode = #tpu.pipeline_mode<synchronous>, transform_indices = @transform_8, window_bounds = array<i64: 1, 128>}, {pipeline_mode = #tpu.pipeline_mode<synchronous>, transform_indices = @transform_9, window_bounds = array<i64: 128, 128>}, {pipeline_mode = #tpu.pipeline_mode<synchronous>, transform_indices = @transform_10, window_bounds = array<i64: 1, 128>}, {transform_indices = @transform_11, window_bounds = array<i64: 16, 128>}]} {
    %c0 = arith.constant 0 : index
    %c0_0 = arith.constant 0 : index
    %0 = vector.load %arg1[%c0, %c0_0] : memref<16x32xf32, #tpu.memory_space<vmem>>, vector<16x32xf32>
    %1 = arith.truncf %0 : vector<16x32xf32> to vector<16x32xbf16>
    %c0_1 = arith.constant 0 : index
    %c0_2 = arith.constant 0 : index
    %2 = vector.load %arg2[%c0_1, %c0_2] : memref<32x128xbf16, #tpu.memory_space<vmem>>, vector<32x128xbf16>
    %cst = arith.constant dense<0.000000e+00> : vector<16x128xf32>
    %3 = tpu.matmul %1, %2, %cst {dimension_numbers = #tpu.dot_dimension_numbers<[1], [0], [0], [1], [0, 0, 1, 1], [], []>} : vector<16x32xbf16>, vector<32x128xbf16>, vector<16x128xf32> -> vector<16x128xf32>
    %c0_3 = arith.constant 0 : index
    %c0_4 = arith.constant 0 : index
    %4 = vector.load %arg3[%c0_3, %c0_4] : memref<1x128xf32, #tpu.memory_space<vmem>>, vector<1x128xf32>
    %5 = vector.broadcast %4 : vector<1x128xf32> to vector<16x128xf32>
    %6 = arith.addf %3, %5 : vector<16x128xf32>
    %cst_5 = arith.constant 0.000000e+00 : f32
    %7 = vector.broadcast %cst_5 : f32 to vector<16x128xf32>
    %8 = arith.maximumf %6, %7 : vector<16x128xf32>
    %9 = arith.truncf %8 : vector<16x128xf32> to vector<16x128xbf16>
    %c0_6 = arith.constant 0 : index
    %c0_7 = arith.constant 0 : index
    %10 = vector.load %arg4[%c0_6, %c0_7] : memref<128x128xbf16, #tpu.memory_space<vmem>>, vector<128x128xbf16>
    %cst_8 = arith.constant dense<0.000000e+00> : vector<16x128xf32>
    %11 = tpu.matmul %9, %10, %cst_8 {dimension_numbers = #tpu.dot_dimension_numbers<[1], [0], [0], [1], [0, 0, 1, 1], [], []>} : vector<16x128xbf16>, vector<128x128xbf16>, vector<16x128xf32> -> vector<16x128xf32>
    %c0_9 = arith.constant 0 : index
    %c0_10 = arith.constant 0 : index
    %12 = vector.load %arg5[%c0_9, %c0_10] : memref<1x128xf32, #tpu.memory_space<vmem>>, vector<1x128xf32>
    %13 = vector.broadcast %12 : vector<1x128xf32> to vector<16x128xf32>
    %14 = arith.addf %11, %13 : vector<16x128xf32>
    %cst_11 = arith.constant 0.000000e+00 : f32
    %15 = vector.broadcast %cst_11 : f32 to vector<16x128xf32>
    %16 = arith.maximumf %14, %15 : vector<16x128xf32>
    %17 = arith.truncf %16 : vector<16x128xf32> to vector<16x128xbf16>
    %c0_12 = arith.constant 0 : index
    %c0_13 = arith.constant 0 : index
    %18 = vector.load %arg6[%c0_12, %c0_13] : memref<128x128xbf16, #tpu.memory_space<vmem>>, vector<128x128xbf16>
    %cst_14 = arith.constant dense<0.000000e+00> : vector<16x128xf32>
    %19 = tpu.matmul %17, %18, %cst_14 {dimension_numbers = #tpu.dot_dimension_numbers<[1], [0], [0], [1], [0, 0, 1, 1], [], []>} : vector<16x128xbf16>, vector<128x128xbf16>, vector<16x128xf32> -> vector<16x128xf32>
    %c0_15 = arith.constant 0 : index
    %c0_16 = arith.constant 0 : index
    %20 = vector.load %arg7[%c0_15, %c0_16] : memref<1x128xf32, #tpu.memory_space<vmem>>, vector<1x128xf32>
    %21 = vector.broadcast %20 : vector<1x128xf32> to vector<16x128xf32>
    %22 = arith.addf %19, %21 : vector<16x128xf32>
    %cst_17 = arith.constant 0.000000e+00 : f32
    %23 = vector.broadcast %cst_17 : f32 to vector<16x128xf32>
    %24 = arith.maximumf %22, %23 : vector<16x128xf32>
    %25 = arith.truncf %24 : vector<16x128xf32> to vector<16x128xbf16>
    %c0_18 = arith.constant 0 : index
    %c0_19 = arith.constant 0 : index
    %26 = vector.load %arg8[%c0_18, %c0_19] : memref<128x128xbf16, #tpu.memory_space<vmem>>, vector<128x128xbf16>
    %cst_20 = arith.constant dense<0.000000e+00> : vector<16x128xf32>
    %27 = tpu.matmul %25, %26, %cst_20 {dimension_numbers = #tpu.dot_dimension_numbers<[1], [0], [0], [1], [0, 0, 1, 1], [], []>} : vector<16x128xbf16>, vector<128x128xbf16>, vector<16x128xf32> -> vector<16x128xf32>
    %c0_21 = arith.constant 0 : index
    %c0_22 = arith.constant 0 : index
    %28 = vector.load %arg9[%c0_21, %c0_22] : memref<1x128xf32, #tpu.memory_space<vmem>>, vector<1x128xf32>
    %29 = vector.broadcast %28 : vector<1x128xf32> to vector<16x128xf32>
    %30 = arith.addf %27, %29 : vector<16x128xf32>
    %cst_23 = arith.constant 0.000000e+00 : f32
    %31 = vector.broadcast %cst_23 : f32 to vector<16x128xf32>
    %32 = arith.maximumf %30, %31 : vector<16x128xf32>
    %33 = arith.truncf %32 : vector<16x128xf32> to vector<16x128xbf16>
    %c0_24 = arith.constant 0 : index
    %c0_25 = arith.constant 0 : index
    %34 = vector.load %arg10[%c0_24, %c0_25] : memref<128x128xbf16, #tpu.memory_space<vmem>>, vector<128x128xbf16>
    %cst_26 = arith.constant dense<0.000000e+00> : vector<16x128xf32>
    %35 = tpu.matmul %33, %34, %cst_26 {dimension_numbers = #tpu.dot_dimension_numbers<[1], [0], [0], [1], [0, 0, 1, 1], [], []>} : vector<16x128xbf16>, vector<128x128xbf16>, vector<16x128xf32> -> vector<16x128xf32>
    %c0_27 = arith.constant 0 : index
    %c0_28 = arith.constant 0 : index
    %36 = vector.load %arg11[%c0_27, %c0_28] : memref<1x128xf32, #tpu.memory_space<vmem>>, vector<1x128xf32>
    %37 = vector.broadcast %36 : vector<1x128xf32> to vector<16x128xf32>
    %38 = arith.addf %35, %37 : vector<16x128xf32>
    %cst_29 = arith.constant 0.000000e+00 : f32
    %39 = vector.broadcast %cst_29 : f32 to vector<16x128xf32>
    %40 = arith.subf %39, %38 : vector<16x128xf32>
    %41 = math.exp %40 : vector<16x128xf32>
    %cst_30 = arith.constant 1.000000e+00 : f32
    %42 = vector.broadcast %cst_30 : f32 to vector<16x128xf32>
    %43 = arith.addf %42, %41 : vector<16x128xf32>
    %44 = tpu.reciprocal %43 {approx = true} : vector<16x128xf32> -> vector<16x128xf32>
    %45 = arith.truncf %44 : vector<16x128xf32> to vector<16x128xbf16>
    %c0_31 = arith.constant 0 : index
    %c0_32 = arith.constant 0 : index
    %46 = vector.load %arg12[%c0_31, %c0_32] : memref<16x128xbf16, #tpu.memory_space<vmem>>, vector<16x128xbf16>
    tpu.vector_store %arg12[%c0_31, %c0_32], %45 {strides = array<i32>} : memref<16x128xbf16, #tpu.memory_space<vmem>>, vector<16x128xbf16>,
    return
  }
  func.func @transform_0(%arg0: i32) -> (i32, i32) {
    %c0_i32 = arith.constant 0 : i32
    %c0_i32_0 = arith.constant 0 : i32
    return %arg0, %c0_i32 : i32, i32
  }
  func.func @transform_1(%arg0: i32) -> (i32, i32) {
    %c0_i32 = arith.constant 0 : i32
    %c0_i32_0 = arith.constant 0 : i32
    %c0_i32_1 = arith.constant 0 : i32
    return %c0_i32, %c0_i32_0 : i32, i32
  }
  func.func @transform_2(%arg0: i32) -> (i32, i32) {
    %c0_i32 = arith.constant 0 : i32
    %c0_i32_0 = arith.constant 0 : i32
    %c0_i32_1 = arith.constant 0 : i32
    return %c0_i32, %c0_i32_0 : i32, i32
  }
  func.func @transform_3(%arg0: i32) -> (i32, i32) {
    %c0_i32 = arith.constant 0 : i32
    %c0_i32_0 = arith.constant 0 : i32
    %c0_i32_1 = arith.constant 0 : i32
    return %c0_i32, %c0_i32_0 : i32, i32
  }
  func.func @transform_4(%arg0: i32) -> (i32, i32) {
    %c0_i32 = arith.constant 0 : i32
    %c0_i32_0 = arith.constant 0 : i32
    %c0_i32_1 = arith.constant 0 : i32
    return %c0_i32, %c0_i32_0 : i32, i32
  }
  func.func @transform_5(%arg0: i32) -> (i32, i32) {
    %c0_i32 = arith.constant 0 : i32
    %c0_i32_0 = arith.constant 0 : i32
    %c0_i32_1 = arith.constant 0 : i32
    return %c0_i32, %c0_i32_0 : i32, i32
  }
  func.func @transform_6(%arg0: i32) -> (i32, i32) {
    %c0_i32 = arith.constant 0 : i32
    %c0_i32_0 = arith.constant 0 : i32
    %c0_i32_1 = arith.constant 0 : i32
    return %c0_i32, %c0_i32_0 : i32, i32
  }
  func.func @transform_7(%arg0: i32) -> (i32, i32) {
    %c0_i32 = arith.constant 0 : i32
    %c0_i32_0 = arith.constant 0 : i32
    %c0_i32_1 = arith.constant 0 : i32
    return %c0_i32, %c0_i32_0 : i32, i32
  }
  func.func @transform_8(%arg0: i32) -> (i32, i32) {
    %c0_i32 = arith.constant 0 : i32
    %c0_i32_0 = arith.constant 0 : i32
    %c0_i32_1 = arith.constant 0 : i32
    return %c0_i32, %c0_i32_0 : i32, i32
  }
  func.func @transform_9(%arg0: i32) -> (i32, i32) {
    %c0_i32 = arith.constant 0 : i32
    %c0_i32_0 = arith.constant 0 : i32
    %c0_i32_1 = arith.constant 0 : i32
    return %c0_i32, %c0_i32_0 : i32, i32
  }
  func.func @transform_10(%arg0: i32) -> (i32, i32) {
    %c0_i32 = arith.constant 0 : i32
    %c0_i32_0 = arith.constant 0 : i32
    %c0_i32_1 = arith.constant 0 : i32
    return %c0_i32, %c0_i32_0 : i32, i32
  }
  func.func @transform_11(%arg0: i32) -> (i32, i32) {
    %c0_i32 = arith.constant 0 : i32
    %c0_i32_0 = arith.constant 0 : i32
    return %arg0, %c0_i32 : i32, i32
  }
}

</mosaic_0001>

<llo_original>
// kernel: tpu_custom_call.1
$region0: #{tpu_custom_call.1}
  #allocation0 [shape = 'u32[]', space=smem, size = 0x4, offset = 0x4, fixed_abs, tag = 'smem constant byte address 0x4 - core index']
  #allocation1 [shape = 'u32[72,128]{1,0:T(1,128)}', space=vmem, size = 0x9000, scoped, tag = 'internal scratch']
  %s0 = inlined_call_operand.hbm [shape: f32[16,32], index: 0, kind: input, shape index: {}]
  %s1 = inlined_call_operand.hbm [shape: bf16[32,128], index: 1, kind: input, shape index: {}]
  %s2 = inlined_call_operand.vmem [shape: f32[1,128], index: 2, kind: input, shape index: {}]
  %s3 = inlined_call_operand.hbm [shape: bf16[128,128], index: 3, kind: input, shape index: {}]
  %s4 = inlined_call_operand.vmem [shape: f32[1,128], index: 4, kind: input, shape index: {}]
  %s5 = inlined_call_operand.hbm [shape: bf16[128,128], index: 5, kind: input, shape index: {}]
  %s6 = inlined_call_operand.vmem [shape: f32[1,128], index: 6, kind: input, shape index: {}]
  %s7 = inlined_call_operand.hbm [shape: bf16[128,128], index: 7, kind: input, shape index: {}]
  %s8 = inlined_call_operand.vmem [shape: f32[1,128], index: 8, kind: input, shape index: {}]
  %s9 = inlined_call_operand.hbm [shape: bf16[128,128], index: 9, kind: input, shape index: {}]
  %s10 = inlined_call_operand.vmem [shape: f32[1,128], index: 10, kind: input, shape index: {}]
  %s11 = inlined_call_operand.hbm [shape: bf16[16,128], index: 11, kind: output, shape index: {}]
  %s12 = sld [smem:[#allocation0]]
  $region78: #{tpu_custom_call.1} parent=0
    _
  %s14 = ssub.s32 1, %s12
  %s15 = scalar_select 0, %s14, %s12
  $region1: #{tpu_custom_call.1} parent=0
    #allocation2 [shape = 'u8[8192]{0}', space=vmem, size = 0x2000, scoped, tag = 'input window, operand 0, single buffered']
    #allocation3 [shape = 's32[1]{0}', space=sflag, size = 0x4, scoped, tag = 'scoped memory for tpu_custom_call.1']
    #allocation4 [shape = 's32[1]{0}', space=sflag, size = 0x4, scoped, tag = 'scoped memory for tpu_custom_call.1']
    #allocation5 [shape = 'u8[8192]{0}', space=vmem, size = 0x2000, scoped, tag = 'input window, operand 1, single buffered']
    #allocation6 [shape = 's32[1]{0}', space=sflag, size = 0x4, scoped, tag = 'scoped memory for tpu_custom_call.1']
    #allocation7 [shape = 'u8[32768]{0}', space=vmem, size = 0x8000, scoped, tag = 'input window, operand 3, single buffered']
    #allocation8 [shape = 'u8[32768]{0}', space=vmem, size = 0x8000, scoped, tag = 'input window, operand 5, single buffered']
    #allocation9 [shape = 's32[1]{0}', space=sflag, size = 0x4, scoped, tag = 'scoped memory for tpu_custom_call.1']
    #allocation10 [shape = 'u8[32768]{0}', space=vmem, size = 0x8000, scoped, tag = 'input window, operand 7, single buffered']
    #allocation11 [shape = 'u8[32768]{0}', space=vmem, size = 0x8000, scoped, tag = 'input window, operand 9, single buffered']
    #allocation12 [shape = 's32[1]{0}', space=sflag, size = 0x4, scoped, tag = 'scoped memory for tpu_custom_call.1']
    #allocation13 [shape = 'u8[4096]{0}', space=vmem, size = 0x1000, scoped, tag = 'output window, operand 0, single buffered']
    %16 = vsyncpa [#allocation3], 0
    %17 = vsyncpa [#allocation6], 0
    %18 = vsyncpa [#allocation9], 0
    %19 = vsyncpa [#allocation12], 0
    %20 = vsyncpa [#allocation4], 0
    // Predicated region
    $region2: #{tpu_custom_call.1} parent=1 // pred_check
      _
    $region3: #{tpu_custom_call.1} parent=1 // pred_check_branch
      %22 = sbr.rel (0) target = $region5
    $region4: #{tpu_custom_call.1} parent=1 // pred_region
      %24 = vsyncadd [#allocation3], 0
      %s25 = sshll.u32 %s0, 4
      %s26 = int_to_ptr.hbm [resolvable:$true] %s25
      %s27 = sshll.u32 [#allocation2], 4
      %s28 = int_to_ptr.vmem [resolvable:$true] %s27
      %33 = dma.hbm_to_vmem [thread:$0]  %s26, 256, %s28, [#allocation3], 128, 128, 8
    $region5: #{tpu_custom_call.1} parent=1 // pred_fallthru
      _
    // Predicated region
    $region6: #{tpu_custom_call.1} parent=1 // pred_check
      _
    $region7: #{tpu_custom_call.1} parent=1 // pred_check_branch
      %35 = sbr.rel (0) target = $region9
    $region8: #{tpu_custom_call.1} parent=1 // pred_region
      %37 = vsyncadd [#allocation6], 0
      %s38 = sshll.u32 %s1, 4
      %s39 = int_to_ptr.hbm [resolvable:$true] %s38
      %s40 = sshll.u32 [#allocation5], 4
      %s41 = int_to_ptr.vmem [resolvable:$true] %s40
      %46 = dma.hbm_to_vmem [thread:$0]  %s39, 256, %s41, [#allocation6], 64, 64, 4
    $region9: #{tpu_custom_call.1} parent=1 // pred_fallthru
      _
    // Predicated region
    $region10: #{tpu_custom_call.1} parent=1 // pred_check
      _
    $region11: #{tpu_custom_call.1} parent=1 // pred_check_branch
      %48 = sbr.rel (0) target = $region13
    $region12: #{tpu_custom_call.1} parent=1 // pred_region
      _
    $region13: #{tpu_custom_call.1} parent=1 // pred_fallthru
      _
    // Predicated region
    $region14: #{tpu_custom_call.1} parent=1 // pred_check
      _
    $region15: #{tpu_custom_call.1} parent=1 // pred_check_branch
      %50 = sbr.rel (0) target = $region17
    $region16: #{tpu_custom_call.1} parent=1 // pred_region
      %52 = vsyncadd [#allocation6], 0
      %s53 = sshll.u32 %s3, 4
      %s54 = int_to_ptr.hbm [resolvable:$true] %s53
      %s55 = sshll.u32 [#allocation7], 4
      %s56 = int_to_ptr.vmem [resolvable:$true] %s55
      %61 = dma.hbm_to_vmem [thread:$0]  %s54, 1024, %s56, [#allocation6], 64, 64, 4
    $region17: #{tpu_custom_call.1} parent=1 // pred_fallthru
      _
    // Predicated region
    $region18: #{tpu_custom_call.1} parent=1 // pred_check
      _
    $region19: #{tpu_custom_call.1} parent=1 // pred_check_branch
      %63 = sbr.rel (0) target = $region21
    $region20: #{tpu_custom_call.1} parent=1 // pred_region
      _
    $region21: #{tpu_custom_call.1} parent=1 // pred_fallthru
      _
    // Predicated region
    $region22: #{tpu_custom_call.1} parent=1 // pred_check
      _
    $region23: #{tpu_custom_call.1} parent=1 // pred_check_branch
      %65 = sbr.rel (0) target = $region25
    $region24: #{tpu_custom_call.1} parent=1 // pred_region
      %67 = vsyncadd [#allocation9], 0
      %s68 = sshll.u32 %s5, 4
      %s69 = int_to_ptr.hbm [resolvable:$true] %s68
      %s70 = sshll.u32 [#allocation8], 4
      %s71 = int_to_ptr.vmem [resolvable:$true] %s70
      %76 = dma.hbm_to_vmem [thread:$0]  %s69, 1024, %s71, [#allocation9], 64, 64, 4
    $region25: #{tpu_custom_call.1} parent=1 // pred_fallthru
      _
    // Predicated region
    $region26: #{tpu_custom_call.1} parent=1 // pred_check
      _
    $region27: #{tpu_custom_call.1} parent=1 // pred_check_branch
      %78 = sbr.rel (0) target = $region29
    $region28: #{tpu_custom_call.1} parent=1 // pred_region
      _
    $region29: #{tpu_custom_call.1} parent=1 // pred_fallthru
      _
    // Predicated region
    $region30: #{tpu_custom_call.1} parent=1 // pred_check
      _
    $region31: #{tpu_custom_call.1} parent=1 // pred_check_branch
      %80 = sbr.rel (0) target = $region33
    $region32: #{tpu_custom_call.1} parent=1 // pred_region
      %82 = vsyncadd [#allocation9], 0
      %s83 = sshll.u32 %s7, 4
      %s84 = int_to_ptr.hbm [resolvable:$true] %s83
      %s85 = sshll.u32 [#allocation10], 4
      %s86 = int_to_ptr.vmem [resolvable:$true] %s85
      %91 = dma.hbm_to_vmem [thread:$0]  %s84, 1024, %s86, [#allocation9], 64, 64, 4
    $region33: #{tpu_custom_call.1} parent=1 // pred_fallthru
      _
    // Predicated region
    $region34: #{tpu_custom_call.1} parent=1 // pred_check
      _
    $region35: #{tpu_custom_call.1} parent=1 // pred_check_branch
      %93 = sbr.rel (0) target = $region37
    $region36: #{tpu_custom_call.1} parent=1 // pred_region
      _
    $region37: #{tpu_custom_call.1} parent=1 // pred_fallthru
      _
    // Predicated region
    $region38: #{tpu_custom_call.1} parent=1 // pred_check
      _
    $region39: #{tpu_custom_call.1} parent=1 // pred_check_branch
      %95 = sbr.rel (0) target = $region41
    $region40: #{tpu_custom_call.1} parent=1 // pred_region
      %97 = vsyncadd [#allocation12], 0
      %s98 = sshll.u32 %s9, 4
      %s99 = int_to_ptr.hbm [resolvable:$true] %s98
      %s100 = sshll.u32 [#allocation11], 4
      %s101 = int_to_ptr.vmem [resolvable:$true] %s100
      %106 = dma.hbm_to_vmem [thread:$0]  %s99, 1024, %s101, [#allocation12], 64, 64, 4
    $region41: #{tpu_custom_call.1} parent=1 // pred_fallthru
      _
    // Predicated region
    $region42: #{tpu_custom_call.1} parent=1 // pred_check
      _
    $region43: #{tpu_custom_call.1} parent=1 // pred_check_branch
      %108 = sbr.rel (0) target = $region45
    $region44: #{tpu_custom_call.1} parent=1 // pred_region
      _
    $region45: #{tpu_custom_call.1} parent=1 // pred_fallthru
      _
    // Predicated region
    $region46: #{tpu_custom_call.1} parent=1 // pred_check
      _
    $region47: #{tpu_custom_call.1} parent=1 // pred_check_branch
      %110 = sbr.rel (0) target = $region49
    $region48: #{tpu_custom_call.1} parent=1 // pred_region
      %112 = dma.done [#allocation3], 256
    $region49: #{tpu_custom_call.1} parent=1 // pred_fallthru
      _
    // Predicated region
    $region50: #{tpu_custom_call.1} parent=1 // pred_check
      _
    $region51: #{tpu_custom_call.1} parent=1 // pred_check_branch
      %114 = sbr.rel (0) target = $region53
    $region52: #{tpu_custom_call.1} parent=1 // pred_region
      %116 = dma.done [#allocation6], 256
    $region53: #{tpu_custom_call.1} parent=1 // pred_fallthru
      _
    // Predicated region
    $region54: #{tpu_custom_call.1} parent=1 // pred_check
      _
    $region55: #{tpu_custom_call.1} parent=1 // pred_check_branch
      %118 = sbr.rel (0) target = $region57
    $region56: #{tpu_custom_call.1} parent=1 // pred_region
      %120 = dma.done [#allocation6], 1024
    $region57: #{tpu_custom_call.1} parent=1 // pred_fallthru
      _
    // Predicated region
    $region58: #{tpu_custom_call.1} parent=1 // pred_check
      _
    $region59: #{tpu_custom_call.1} parent=1 // pred_check_branch
      %122 = sbr.rel (0) target = $region61
    $region60: #{tpu_custom_call.1} parent=1 // pred_region
      %124 = dma.done [#allocation9], 1024
    $region61: #{tpu_custom_call.1} parent=1 // pred_fallthru
      _
    // Predicated region
    $region62: #{tpu_custom_call.1} parent=1 // pred_check
      _
    $region63: #{tpu_custom_call.1} parent=1 // pred_check_branch
      %126 = sbr.rel (0) target = $region65
    $region64: #{tpu_custom_call.1} parent=1 // pred_region
      %128 = dma.done [#allocation9], 1024
    $region65: #{tpu_custom_call.1} parent=1 // pred_fallthru
      _
    // Predicated region
    $region66: #{tpu_custom_call.1} parent=1 // pred_check
      _
    $region67: #{tpu_custom_call.1} parent=1 // pred_check_branch
      %130 = sbr.rel (0) target = $region69
    $region68: #{tpu_custom_call.1} parent=1 // pred_region
      %132 = dma.done [#allocation12], 1024
    $region69: #{tpu_custom_call.1} parent=1 // pred_fallthru
      _
    %v134 = vld [vmem:[#allocation2] sm:$0xff]
    %v135 = vld [vmem:[#allocation2 + $0x8] sm:$0xff]
    %v136 = vpack.c.bf16 %v135, %v134
    %v137 = vld [vmem:[#allocation5] sm:$0xf]
    %v138 = vld [vmem:[#allocation5 + $0x4] sm:$0xf]
    %v139 = vld [vmem:[#allocation5 + $0x8] sm:$0xf]
    %v140 = vld [vmem:[#allocation5 + $0xc] sm:$0xf]
    %v141 = vld [vmem:[%s2] sm:$0x1]
    %v143 = vperm.slane %v141, 0
    %v149 = vunpack.c.l.b16 %v137
    %v150 = vunpack.c.l.b16 %v138
    %v151 = vunpack.c.l.b16 %v139
    %v152 = vunpack.c.l.b16 %v140
    %v153 = vpack.c.b16 %v150, %v149
    %v154 = vpack.c.b16 %v152, %v151
    %vm157 = vcmask 261120
    %v159 = vsel %vm157, %v136, 0
    %161 = vmatpush.bf16.msra.mxu0 0
    %162 = vmatpush.bf16.msra.mxu0 0
    %163 = vmatpush.bf16.msra.mxu0 0
    %164 = vmatpush.bf16.msra.mxu0 0
    %165 = vmatpush.bf16.msra.mxu0 0
    %166 = vmatpush.bf16.msra.mxu0 0
    %167 = vmatpush.bf16.msra.mxu0 %v154
    %168 = vmatpush.bf16.msra.mxu0 %v153
    %169 = vmatmul.bf16.gmra.mxu0 %v159
    %v170 = vpop.f32.mrf.mxu0
    %v171 = vadd.f32 %v143, %v170
    %v172 = vpop.f32.mrf.mxu0
    %v173 = vadd.f32 %v143, %v172
    %174 = vdwg.mxu0
    %v175 = vmax.f32 %v171, 0.0
    %v176 = vmax.f32 %v173, 0.0
    %v177 = vpack.c.bf16 %v176, %v175
    %v178 = vld [vmem:[#allocation7] sm:$0xf]
    %v179 = vld [vmem:[#allocation7 + $0x4] sm:$0xf]
    %v180 = vld [vmem:[#allocation7 + $0x8] sm:$0xf]
    %v181 = vld [vmem:[#allocation7 + $0xc] sm:$0xf]
    %v182 = vld [vmem:[#allocation7 + $0x10] sm:$0xf]
    %v183 = vld [vmem:[#allocation7 + $0x14] sm:$0xf]
    %v184 = vld [vmem:[#allocation7 + $0x18] sm:$0xf]
    %v185 = vld [vmem:[#allocation7 + $0x1c] sm:$0xf]
    %v186 = vld [vmem:[#allocation7 + $0x20] sm:$0xf]
    %v187 = vld [vmem:[#allocation7 + $0x24] sm:$0xf]
    %v188 = vld [vmem:[#allocation7 + $0x28] sm:$0xf]
    %v189 = vld [vmem:[#allocation7 + $0x2c] sm:$0xf]
    %v190 = vld [vmem:[#allocation7 + $0x30] sm:$0xf]
    %v191 = vld [vmem:[#allocation7 + $0x34] sm:$0xf]
    %v192 = vld [vmem:[#allocation7 + $0x38] sm:$0xf]
    %v193 = vld [vmem:[#allocation7 + $0x3c] sm:$0xf]
    %v194 = vld [vmem:[%s4] sm:$0x1]
    %v196 = vperm.slane %v194, 0
    %v214 = vunpack.c.l.b16 %v178
    %v215 = vunpack.c.l.b16 %v179
    %v216 = vunpack.c.l.b16 %v180
    %v217 = vunpack.c.l.b16 %v181
    %v218 = vunpack.c.l.b16 %v182
    %v219 = vunpack.c.l.b16 %v183
    %v220 = vunpack.c.l.b16 %v184
    %v221 = vunpack.c.l.b16 %v185
    %v222 = vunpack.c.l.b16 %v186
    %v223 = vunpack.c.l.b16 %v187
    %v224 = vunpack.c.l.b16 %v188
    %v225 = vunpack.c.l.b16 %v189
    %v226 = vunpack.c.l.b16 %v190
    %v227 = vunpack.c.l.b16 %v191
    %v228 = vunpack.c.l.b16 %v192
    %v229 = vunpack.c.l.b16 %v193
    %v230 = vpack.c.b16 %v215, %v214
    %v231 = vpack.c.b16 %v217, %v216
    %v232 = vpack.c.b16 %v219, %v218
    %v233 = vpack.c.b16 %v221, %v220
    %v234 = vpack.c.b16 %v223, %v222
    %v235 = vpack.c.b16 %v225, %v224
    %v236 = vpack.c.b16 %v227, %v226
    %v237 = vpack.c.b16 %v229, %v228
    %246 = vmatpush.bf16.msra.mxu0 %v237
    %247 = vmatpush.bf16.msra.mxu0 %v236
    %248 = vmatpush.bf16.msra.mxu0 %v235
    %249 = vmatpush.bf16.msra.mxu0 %v234
    %250 = vmatpush.bf16.msra.mxu0 %v233
    %251 = vmatpush.bf16.msra.mxu0 %v232
    %252 = vmatpush.bf16.msra.mxu0 %v231
    %253 = vmatpush.bf16.msra.mxu0 %v230
    %254 = vmatmul.bf16.gmra.mxu0 %v177
    %v255 = vpop.f32.mrf.mxu0
    %v256 = vadd.f32 %v196, %v255
    %v257 = vpop.f32.mrf.mxu0
    %v258 = vadd.f32 %v196, %v257
    %259 = vdwg.mxu0
    %v260 = vmax.f32 %v256, 0.0
    %v261 = vmax.f32 %v258, 0.0
    %v262 = vpack.c.bf16 %v261, %v260
    %v263 = vld [vmem:[#allocation8] sm:$0xf]
    %v264 = vld [vmem:[#allocation8 + $0x4] sm:$0xf]
    %v265 = vld [vmem:[#allocation8 + $0x8] sm:$0xf]
    %v266 = vld [vmem:[#allocation8 + $0xc] sm:$0xf]
    %v267 = vld [vmem:[#allocation8 + $0x10] sm:$0xf]
    %v268 = vld [vmem:[#allocation8 + $0x14] sm:$0xf]
    %v269 = vld [vmem:[#allocation8 + $0x18] sm:$0xf]
    %v270 = vld [vmem:[#allocation8 + $0x1c] sm:$0xf]
    %v271 = vld [vmem:[#allocation8 + $0x20] sm:$0xf]
    %v272 = vld [vmem:[#allocation8 + $0x24] sm:$0xf]
    %v273 = vld [vmem:[#allocation8 + $0x28] sm:$0xf]
    %v274 = vld [vmem:[#allocation8 + $0x2c] sm:$0xf]
    %v275 = vld [vmem:[#allocation8 + $0x30] sm:$0xf]
    %v276 = vld [vmem:[#allocation8 + $0x34] sm:$0xf]
    %v277 = vld [vmem:[#allocation8 + $0x38] sm:$0xf]
    %v278 = vld [vmem:[#allocation8 + $0x3c] sm:$0xf]
    %v279 = vld [vmem:[%s6] sm:$0x1]
    %v281 = vperm.slane %v279, 0
    %v299 = vunpack.c.l.b16 %v263
    %v300 = vunpack.c.l.b16 %v264
    %v301 = vunpack.c.l.b16 %v265
    %v302 = vunpack.c.l.b16 %v266
    %v303 = vunpack.c.l.b16 %v267
    %v304 = vunpack.c.l.b16 %v268
    %v305 = vunpack.c.l.b16 %v269
    %v306 = vunpack.c.l.b16 %v270
    %v307 = vunpack.c.l.b16 %v271
    %v308 = vunpack.c.l.b16 %v272
    %v309 = vunpack.c.l.b16 %v273
    %v310 = vunpack.c.l.b16 %v274
    %v311 = vunpack.c.l.b16 %v275
    %v312 = vunpack.c.l.b16 %v276
    %v313 = vunpack.c.l.b16 %v277
    %v314 = vunpack.c.l.b16 %v278
    %v315 = vpack.c.b16 %v300, %v299
    %v316 = vpack.c.b16 %v302, %v301
    %v317 = vpack.c.b16 %v304, %v303
    %v318 = vpack.c.b16 %v306, %v305
    %v319 = vpack.c.b16 %v308, %v307
    %v320 = vpack.c.b16 %v310, %v309
    %v321 = vpack.c.b16 %v312, %v311
    %v322 = vpack.c.b16 %v314, %v313
    %331 = vmatpush.bf16.msra.mxu0 %v322
    %332 = vmatpush.bf16.msra.mxu0 %v321
    %333 = vmatpush.bf16.msra.mxu0 %v320
    %334 = vmatpush.bf16.msra.mxu0 %v319
    %335 = vmatpush.bf16.msra.mxu0 %v318
    %336 = vmatpush.bf16.msra.mxu0 %v317
    %337 = vmatpush.bf16.msra.mxu0 %v316
    %338 = vmatpush.bf16.msra.mxu0 %v315
    %339 = vmatmul.bf16.gmra.mxu0 %v262
    %v340 = vpop.f32.mrf.mxu0
    %v341 = vadd.f32 %v281, %v340
    %v342 = vpop.f32.mrf.mxu0
    %v343 = vadd.f32 %v281, %v342
    %344 = vdwg.mxu0
    %v345 = vmax.f32 %v341, 0.0
    %v346 = vmax.f32 %v343, 0.0
    %v347 = vpack.c.bf16 %v346, %v345
    %v348 = vld [vmem:[#allocation10] sm:$0xf]
    %v349 = vld [vmem:[#allocation10 + $0x4] sm:$0xf]
    %v350 = vld [vmem:[#allocation10 + $0x8] sm:$0xf]
    %v351 = vld [vmem:[#allocation10 + $0xc] sm:$0xf]
    %v352 = vld [vmem:[#allocation10 + $0x10] sm:$0xf]
    %v353 = vld [vmem:[#allocation10 + $0x14] sm:$0xf]
    %v354 = vld [vmem:[#allocation10 + $0x18] sm:$0xf]
    %v355 = vld [vmem:[#allocation10 + $0x1c] sm:$0xf]
    %v356 = vld [vmem:[#allocation10 + $0x20] sm:$0xf]
    %v357 = vld [vmem:[#allocation10 + $0x24] sm:$0xf]
    %v358 = vld [vmem:[#allocation10 + $0x28] sm:$0xf]
    %v359 = vld [vmem:[#allocation10 + $0x2c] sm:$0xf]
    %v360 = vld [vmem:[#allocation10 + $0x30] sm:$0xf]
    %v361 = vld [vmem:[#allocation10 + $0x34] sm:$0xf]
    %v362 = vld [vmem:[#allocation10 + $0x38] sm:$0xf]
    %v363 = vld [vmem:[#allocation10 + $0x3c] sm:$0xf]
    %v364 = vld [vmem:[%s8] sm:$0x1]
    %v366 = vperm.slane %v364, 0
    %v384 = vunpack.c.l.b16 %v348
    %v385 = vunpack.c.l.b16 %v349
    %v386 = vunpack.c.l.b16 %v350
    %v387 = vunpack.c.l.b16 %v351
    %v388 = vunpack.c.l.b16 %v352
    %v389 = vunpack.c.l.b16 %v353
    %v390 = vunpack.c.l.b16 %v354
    %v391 = vunpack.c.l.b16 %v355
    %v392 = vunpack.c.l.b16 %v356
    %v393 = vunpack.c.l.b16 %v357
    %v394 = vunpack.c.l.b16 %v358
    %v395 = vunpack.c.l.b16 %v359
    %v396 = vunpack.c.l.b16 %v360
    %v397 = vunpack.c.l.b16 %v361
    %v398 = vunpack.c.l.b16 %v362
    %v399 = vunpack.c.l.b16 %v363
    %v400 = vpack.c.b16 %v385, %v384
    %v401 = vpack.c.b16 %v387, %v386
    %v402 = vpack.c.b16 %v389, %v388
    %v403 = vpack.c.b16 %v391, %v390
    %v404 = vpack.c.b16 %v393, %v392
    %v405 = vpack.c.b16 %v395, %v394
    %v406 = vpack.c.b16 %v397, %v396
    %v407 = vpack.c.b16 %v399, %v398
    %416 = vmatpush.bf16.msra.mxu0 %v407
    %417 = vmatpush.bf16.msra.mxu0 %v406
    %418 = vmatpush.bf16.msra.mxu0 %v405
    %419 = vmatpush.bf16.msra.mxu0 %v404
    %420 = vmatpush.bf16.msra.mxu0 %v403
    %421 = vmatpush.bf16.msra.mxu0 %v402
    %422 = vmatpush.bf16.msra.mxu0 %v401
    %423 = vmatpush.bf16.msra.mxu0 %v400
    %424 = vmatmul.bf16.gmra.mxu0 %v347
    %v425 = vpop.f32.mrf.mxu0
    %v426 = vadd.f32 %v366, %v425
    %v427 = vpop.f32.mrf.mxu0
    %v428 = vadd.f32 %v366, %v427
    %429 = vdwg.mxu0
    %v430 = vmax.f32 %v426, 0.0
    %v431 = vmax.f32 %v428, 0.0
    %v432 = vpack.c.bf16 %v431, %v430
    %v433 = vld [vmem:[#allocation11] sm:$0xf]
    %v434 = vld [vmem:[#allocation11 + $0x4] sm:$0xf]
    %v435 = vld [vmem:[#allocation11 + $0x8] sm:$0xf]
    %v436 = vld [vmem:[#allocation11 + $0xc] sm:$0xf]
    %v437 = vld [vmem:[#allocation11 + $0x10] sm:$0xf]
    %v438 = vld [vmem:[#allocation11 + $0x14] sm:$0xf]
    %v439 = vld [vmem:[#allocation11 + $0x18] sm:$0xf]
    %v440 = vld [vmem:[#allocation11 + $0x1c] sm:$0xf]
    %v441 = vld [vmem:[#allocation11 + $0x20] sm:$0xf]
    %v442 = vld [vmem:[#allocation11 + $0x24] sm:$0xf]
    %v443 = vld [vmem:[#allocation11 + $0x28] sm:$0xf]
    %v444 = vld [vmem:[#allocation11 + $0x2c] sm:$0xf]
    %v445 = vld [vmem:[#allocation11 + $0x30] sm:$0xf]
    %v446 = vld [vmem:[#allocation11 + $0x34] sm:$0xf]
    %v447 = vld [vmem:[#allocation11 + $0x38] sm:$0xf]
    %v448 = vld [vmem:[#allocation11 + $0x3c] sm:$0xf]
    %v449 = vld [vmem:[%s10] sm:$0x1]
    %v451 = vperm.slane %v449, 0
    %v469 = vunpack.c.l.b16 %v433
    %v470 = vunpack.c.l.b16 %v434
    %v471 = vunpack.c.l.b16 %v435
    %v472 = vunpack.c.l.b16 %v436
    %v473 = vunpack.c.l.b16 %v437
    %v474 = vunpack.c.l.b16 %v438
    %v475 = vunpack.c.l.b16 %v439
    %v476 = vunpack.c.l.b16 %v440
    %v477 = vunpack.c.l.b16 %v441
    %v478 = vunpack.c.l.b16 %v442
    %v479 = vunpack.c.l.b16 %v443
    %v480 = vunpack.c.l.b16 %v444
    %v481 = vunpack.c.l.b16 %v445
    %v482 = vunpack.c.l.b16 %v446
    %v483 = vunpack.c.l.b16 %v447
    %v484 = vunpack.c.l.b16 %v448
    %v485 = vpack.c.b16 %v470, %v469
    %v486 = vpack.c.b16 %v472, %v471
    %v487 = vpack.c.b16 %v474, %v473
    %v488 = vpack.c.b16 %v476, %v475
    %v489 = vpack.c.b16 %v478, %v477
    %v490 = vpack.c.b16 %v480, %v479
    %v491 = vpack.c.b16 %v482, %v481
    %v492 = vpack.c.b16 %v484, %v483
    %501 = vmatpush.bf16.msra.mxu0 %v492
    %502 = vmatpush.bf16.msra.mxu0 %v491
    %503 = vmatpush.bf16.msra.mxu0 %v490
    %504 = vmatpush.bf16.msra.mxu0 %v489
    %505 = vmatpush.bf16.msra.mxu0 %v488
    %506 = vmatpush.bf16.msra.mxu0 %v487
    %507 = vmatpush.bf16.msra.mxu0 %v486
    %508 = vmatpush.bf16.msra.mxu0 %v485
    %509 = vmatmul.bf16.gmra.mxu0 %v432
    %v510 = vpop.f32.mrf.mxu0
    %v511 = vadd.f32 %v451, %v510
    %v512 = vpop.f32.mrf.mxu0
    %v513 = vadd.f32 %v451, %v512
    %514 = vdwg.mxu0
    %v515 = vsub.f32 0.0, %v511
    %v516 = vsub.f32 0.0, %v513
    %v517 = vmul.f32 %v515, 1.442695
    %v518 = vpow.pop %v517
    %v519 = vmul.f32 %v516, 1.442695
    %v520 = vpow.pop %v519
    %v521 = vadd.f32 %v518, 1.0
    %v522 = vadd.f32 %v520, 1.0
    %v523 = vrcp.pop %v521
    %v524 = vrcp.pop %v522
    %v525 = vpack.c.bf16 %v523, %v523
    %v526 = vpack.c.bf16 %v524, %v524
    %527 = vst [vmem:[#allocation13] sm:$0xf] %v525
    %528 = vst [vmem:[#allocation13 + $0x4] sm:$0xf] %v526
    // Predicated region
    $region70: #{tpu_custom_call.1} parent=1 // pred_check
      _
    $region71: #{tpu_custom_call.1} parent=1 // pred_check_branch
      %530 = sbr.rel (0) target = $region73
    $region72: #{tpu_custom_call.1} parent=1 // pred_region
      %532 = vsyncadd [#allocation4], 0
      %s533 = sshll.u32 [#allocation13], 4
      %s534 = int_to_ptr.vmem [resolvable:$true] %s533
      %s535 = sshll.u32 %s11, 4
      %s536 = int_to_ptr.hbm [resolvable:$true] %s535
      %541 = dma.vmem_to_hbm [thread:$0]  %s534, 128, %s536, [#allocation4], 64, 64, 4
    $region73: #{tpu_custom_call.1} parent=1 // pred_fallthru
      _
    // Predicated region
    $region74: #{tpu_custom_call.1} parent=1 // pred_check
      _
    $region75: #{tpu_custom_call.1} parent=1 // pred_check_branch
      %543 = sbr.rel (0) target = $region77
    $region76: #{tpu_custom_call.1} parent=1 // pred_region
      %545 = dma.done [#allocation4], 128
    $region77: #{tpu_custom_call.1} parent=1 // pred_fallthru
      _
    %546 = vsyncpa [#allocation3], 1
    %547 = vsyncpa [#allocation6], 1
    %548 = vsyncpa [#allocation9], 1
    %549 = vsyncpa [#allocation12], 1
    %550 = vsyncpa [#allocation4], 1

</llo_original>
